<compile_context>
chip_gen: v6e
topology: v6e:2x2x1
jax: 0.10.0
libtpu: 0.0.40
codegen_flags: <defaults>
</compile_context>

<pallas_src>
import math

import jax
import jax.numpy as jnp
from jax import lax
from jax.experimental import pallas as pl
from jax.experimental.pallas import tpu as pltpu

DIM = 16              # embedding dim (module default)
M_CONST = 10000.0     # frequency base (module default)
HALF = DIM // 2       # NOTE: spec module divides log(M) by half_dim (=8), NOT half_dim-1
GROUP = 128 // DIM    # timesteps packed per 128-lane row (= 8)

_LOG_M = math.log(M_CONST)
_HALF_PI = math.pi / 2.0

# cos(p) == sin(p + pi/2).  The fused path does ONE sin pass over all lanes
# (same transcendental count as separate sin/cos over half the lanes each) at
# the cost of ~ulp(phase) argument error on the cos lanes (~4e-6 for timesteps
# ~1e2, ~3e-5 for ~1e3).  Set True for bit-exact cos (2x VPU work at large B).
_EXACT_COS = False


def _sinusoidal_kernel(x_ref, o_ref):
    """x_ref: (rows, 128) f32 — each timestep value replicated across its 16 lanes.
    o_ref: (rows, 128)        — row-packed (8 timesteps x 16 dims) embedding block.

    Lane j of a row: timestep slot t = j // 16, embedding dim d = j % 16,
    frequency index k = d % 8; d < 8 -> sin, d >= 8 -> cos.
    """
    lane = lax.broadcasted_iota(jnp.int32, (1, 128), 1)
    d = lane % DIM                                    # 0..15
    k = (d % HALF).astype(jnp.float32)                # frequency index 0..7
    freq = jnp.exp(k * (-_LOG_M / HALF))              # (1,128); tiny per-step EUP cost
    x = x_ref[...]                                    # (rows, 128) f32
    if _EXACT_COS:
        phase = x * freq
        out = jnp.where(d < HALF, jnp.sin(phase), jnp.cos(phase))
    else:
        offset = jnp.where(d < HALF, 0.0, _HALF_PI).astype(jnp.float32)
        out = jnp.sin(x * freq + offset)              # single full-lane sin pass
    o_ref[...] = out.astype(o_ref.dtype)              # single full 128-lane store


def _round_up(a, b):
    return pl.cdiv(a, b) * b


def sinusoidal_pos_emb(x, dim=DIM, block_b=32768, out_dtype=jnp.float32):
    """x: (...,) timesteps -> (..., dim) embedding (matches the PyTorch forward).

    out_dtype=jnp.bfloat16 halves output HBM/VMEM traffic if the consumer is a
    bf16 MLP; in-kernel compute stays f32 either way.
    """
    assert dim == DIM, "kernel is specialized for dim=16"
    orig_shape = x.shape
    x_flat = x.reshape(-1).astype(jnp.float32)
    B = x_flat.shape[0]

    # --- tiling ------------------------------------------------------------
    # Small B: one grid step (per-step overhead ~0.35us dominates this op).
    # Large B: >=2 "parallel" steps so both v7x TensorCores get work; blocks of
    # ~block_b timesteps (~2 MiB of f32 output per buffer at the default).
    if B <= 4096:
        n_blocks = 1
    else:
        n_blocks = max(2, pl.cdiv(B, block_b))
    tb = _round_up(pl.cdiv(B, n_blocks), 64)   # timesteps/block; /64 keeps rows % 8 == 0
    b_pad = n_blocks * tb
    rows_pb = tb // GROUP
    rows_total = b_pad // GROUP

    # --- input layout plumbing (pad + tiny broadcast; NO output transpose) --
    if b_pad != B:
        x_flat = jnp.pad(x_flat, (0, b_pad - B))
    # Replicate each timestep across its 16 output lanes so the kernel input
    # block already has the row-packed layout of the output.  Pure layout
    # plumbing; the x*freq multiply stays in-kernel.
    x_rows = jnp.broadcast_to(x_flat[:, None], (b_pad, DIM)).reshape(rows_total, 128)

    # --- VMEM budget: raise scoped limit only if a big user tile needs it ---
    tile_in = rows_pb * 128 * 4
    tile_out = rows_pb * 128 * jnp.dtype(out_dtype).itemsize
    footprint = 2 * (tile_in + tile_out)       # double-buffered in + out
    cp_kwargs = dict(dimension_semantics=("parallel",))
    if footprint > 14 * (1 << 20):             # v5e scoped-VMEM default is 16 MiB
        cp_kwargs["vmem_limit_bytes"] = footprint + (2 << 20)

    out_rows = pl.pallas_call(
        _sinusoidal_kernel,
        out_shape=jax.ShapeDtypeStruct((rows_total, 128), out_dtype),
        grid=(n_blocks,),
        in_specs=[pl.BlockSpec((rows_pb, 128), lambda i: (i, 0))],
        out_specs=pl.BlockSpec((rows_pb, 128), lambda i: (i, 0)),
        compiler_params=pltpu.CompilerParams(**cp_kwargs),
    )(x_rows)

    # Row-major (rows_total, 128) == (b_pad, DIM): this reshape is metadata-only.
    emb = out_rows.reshape(b_pad, DIM)[:B]
    return emb.reshape(*orig_shape, DIM)


def _reference(x, dim=DIM, M=M_CONST):
    """Pure-JAX reference matching the PyTorch forward exactly."""
    half = dim // 2
    emb = math.log(M) / half
    emb = jnp.exp(jnp.arange(half, dtype=jnp.float32) * -emb)
    emb = x[..., None].astype(jnp.float32) * emb[None, ...]
    return jnp.concatenate([jnp.sin(emb), jnp.cos(emb)], axis=-1)


if __name__ == "__main__":
    key = jax.random.PRNGKey(0)
    B = 8
    # deterministic example "timesteps" (diffusion-style, modest magnitude)
    x = jax.random.uniform(key, (B,), dtype=jnp.float32) * 100.0

    out = jax.block_until_ready(sinusoidal_pos_emb(x))
    ref = _reference(x)

    assert out.shape == (B, DIM), out.shape
    # fused cos=sin(p+pi/2) introduces <~4e-6 abs error at these magnitudes
    assert jnp.allclose(out, ref, atol=2e-5, rtol=2e-5), (
        "mismatch vs reference, max abs err = "
        + str(float(jnp.max(jnp.abs(out - ref)))))

    print("KERNEL_OK")
</pallas_src>

<mosaic_0001>
module attributes {stable_mosaic.version = 11 : i64} {
  func.func @_sinusoidal_kernel(%arg0: i32, %arg1: memref<8x128xf32, #tpu.memory_space<vmem>>, %arg2: memref<8x128xf32, #tpu.memory_space<vmem>>) attributes {dimension_semantics = [#tpu.dimension_semantics<parallel>], iteration_bounds = array<i64: 1>, scalar_prefetch = 0 : i64, scratch_operands = 0 : i64, tpu.core_type = #tpu.core_type<tc>, window_params = [{transform_indices = @transform_0, window_bounds = array<i64: 8, 128>}, {transform_indices = @transform_1, window_bounds = array<i64: 8, 128>}]} {
    %0 = tpu.iota {dimensions = array<i32: 1>} : vector<1x128xi32>
    %c16_i32 = arith.constant 16 : i32
    %c0_i32 = arith.constant 0 : i32
    %1 = arith.cmpi eq, %c16_i32, %c0_i32 : i32
    %c1_i32 = arith.constant 1 : i32
    %2 = arith.select %1, %c1_i32, %c16_i32 : i32
    %3 = vector.broadcast %2 : i32 to vector<1x128xi32>
    %4 = arith.remsi %0, %3 : vector<1x128xi32>
    %c0_i32_0 = arith.constant 0 : i32
    %5 = vector.broadcast %c0_i32_0 : i32 to vector<1x128xi32>
    %6 = arith.cmpi ne, %4, %5 : vector<1x128xi32>
    %c0_i32_1 = arith.constant 0 : i32
    %7 = vector.broadcast %c0_i32_1 : i32 to vector<1x128xi32>
    %8 = arith.cmpi slt, %4, %7 : vector<1x128xi32>
    %c0_i32_2 = arith.constant 0 : i32
    %9 = arith.cmpi slt, %2, %c0_i32_2 : i32
    %10 = vector.broadcast %9 : i1 to vector<1x128xi1>
    %11 = vector.broadcast %10 : vector<1x128xi1> to vector<1x128xi1>
    %12 = arith.xori %8, %11 : vector<1x128xi1>
    %13 = arith.andi %12, %6 : vector<1x128xi1>
    %14 = vector.broadcast %2 : i32 to vector<1x128xi32>
    %15 = arith.addi %4, %14 : vector<1x128xi32>
    %16 = arith.select %13, %15, %4 : vector<1x128xi1>, vector<1x128xi32>
    %c8_i32 = arith.constant 8 : i32
    %c0_i32_3 = arith.constant 0 : i32
    %17 = arith.cmpi eq, %c8_i32, %c0_i32_3 : i32
    %c1_i32_4 = arith.constant 1 : i32
    %18 = arith.select %17, %c1_i32_4, %c8_i32 : i32
    %19 = vector.broadcast %18 : i32 to vector<1x128xi32>
    %20 = arith.remsi %16, %19 : vector<1x128xi32>
    %c0_i32_5 = arith.constant 0 : i32
    %21 = vector.broadcast %c0_i32_5 : i32 to vector<1x128xi32>
    %22 = arith.cmpi ne, %20, %21 : vector<1x128xi32>
    %c0_i32_6 = arith.constant 0 : i32
    %23 = vector.broadcast %c0_i32_6 : i32 to vector<1x128xi32>
    %24 = arith.cmpi slt, %20, %23 : vector<1x128xi32>
    %c0_i32_7 = arith.constant 0 : i32
    %25 = arith.cmpi slt, %18, %c0_i32_7 : i32
    %26 = vector.broadcast %25 : i1 to vector<1x128xi1>
    %27 = vector.broadcast %26 : vector<1x128xi1> to vector<1x128xi1>
    %28 = arith.xori %24, %27 : vector<1x128xi1>
    %29 = arith.andi %28, %22 : vector<1x128xi1>
    %30 = vector.broadcast %18 : i32 to vector<1x128xi32>
    %31 = arith.addi %20, %30 : vector<1x128xi32>
    %32 = arith.select %29, %31, %20 : vector<1x128xi1>, vector<1x128xi32>
    %33 = arith.sitofp %32 : vector<1x128xi32> to vector<1x128xf32>
    %cst = arith.constant -1.15129256 : f32
    %34 = vector.broadcast %cst : f32 to vector<1x128xf32>
    %35 = arith.mulf %33, %34 : vector<1x128xf32>
    %36 = math.exp %35 : vector<1x128xf32>
    %c0 = arith.constant 0 : index
    %c0_8 = arith.constant 0 : index
    %37 = vector.load %arg1[%c0, %c0_8] : memref<8x128xf32, #tpu.memory_space<vmem>>, vector<8x128xf32>
    %c8_i32_9 = arith.constant 8 : i32
    %38 = vector.broadcast %c8_i32_9 : i32 to vector<1x128xi32>
    %39 = arith.cmpi slt, %16, %38 : vector<1x128xi32>
    %cst_10 = arith.constant 0.000000e+00 : f32
    %cst_11 = arith.constant 1.57079637 : f32
    %40 = vector.broadcast %cst_10 : f32 to vector<1x128xf32>
    %41 = vector.broadcast %cst_11 : f32 to vector<1x128xf32>
    %42 = arith.select %39, %40, %41 : vector<1x128xi1>, vector<1x128xf32>
    %43 = vector.broadcast %36 : vector<1x128xf32> to vector<8x128xf32>
    %44 = arith.mulf %37, %43 : vector<8x128xf32>
    %45 = vector.broadcast %42 : vector<1x128xf32> to vector<8x128xf32>
    %46 = arith.addf %44, %45 : vector<8x128xf32>
    %47 = math.sin %46 : vector<8x128xf32>
    %c0_12 = arith.constant 0 : index
    %c0_13 = arith.constant 0 : index
    %48 = vector.load %arg2[%c0_12, %c0_13] : memref<8x128xf32, #tpu.memory_space<vmem>>, vector<8x128xf32>
    tpu.vector_store %arg2[%c0_12, %c0_13], %47 {strides = array<i32>} : memref<8x128xf32, #tpu.memory_space<vmem>>, vector<8x128xf32>,
    return
  }
  func.func @transform_0(%arg0: i32) -> (i32, i32) {
    %c0_i32 = arith.constant 0 : i32
    %c0_i32_0 = arith.constant 0 : i32
    return %arg0, %c0_i32 : i32, i32
  }
  func.func @transform_1(%arg0: i32) -> (i32, i32) {
    %c0_i32 = arith.constant 0 : i32
    %c0_i32_0 = arith.constant 0 : i32
    return %arg0, %c0_i32 : i32, i32
  }
}

</mosaic_0001>

<llo_original>
// kernel: tpu_custom_call.1
$region0: #{tpu_custom_call.1}
  #allocation0 [shape = 'u32[]', space=smem, size = 0x4, offset = 0x4, fixed_abs, tag = 'smem constant byte address 0x4 - core index']
  #allocation1 [shape = 'u32[144,128]{1,0:T(1,128)}', space=vmem, size = 0x12000, scoped, tag = 'internal scratch']
  %s0 = inlined_call_operand.hbm [shape: f32[8,128], index: 0, kind: input, shape index: {}]
  %s1 = inlined_call_operand.hbm [shape: f32[8,128], index: 1, kind: output, shape index: {}]
  %s2 = sld [smem:[#allocation0]]
  $region18: #{tpu_custom_call.1} parent=0
    _
  %s4 = ssub.s32 1, %s2
  %s5 = scalar_select 0, %s4, %s2
  $region1: #{tpu_custom_call.1} parent=0
    #allocation2 [shape = 'u8[4096]{0}', space=vmem, size = 0x1000, scoped, tag = 'input window, operand 0, single buffered']
    #allocation3 [shape = 's32[1]{0}', space=sflag, size = 0x4, scoped, tag = 'scoped memory for tpu_custom_call.1']
    #allocation4 [shape = 's32[1]{0}', space=sflag, size = 0x4, scoped, tag = 'scoped memory for tpu_custom_call.1']
    #allocation5 [shape = 'u8[4096]{0}', space=vmem, size = 0x1000, scoped, tag = 'output window, operand 0, single buffered']
    %6 = vsyncpa [#allocation3], 0
    %7 = vsyncpa [#allocation4], 0
    // Predicated region
    $region2: #{tpu_custom_call.1} parent=1 // pred_check
      _
    $region3: #{tpu_custom_call.1} parent=1 // pred_check_branch
      %9 = sbr.rel (0) target = $region5
    $region4: #{tpu_custom_call.1} parent=1 // pred_region
      %s11 = ssub.s32 128, 128
      %12 = vsyncadd [#allocation3], %s11
      %s14 = sshll.u32 [#allocation2], 4
      %s15 = int_to_ptr.vmem [resolvable:$true] %s14
      %17 = dma.hbm_to_vmem [thread:$0]  %s0, 128, %s15, [#allocation3]
    $region5: #{tpu_custom_call.1} parent=1 // pred_fallthru
      _
    // Predicated region
    $region6: #{tpu_custom_call.1} parent=1 // pred_check
      _
    $region7: #{tpu_custom_call.1} parent=1 // pred_check_branch
      %19 = sbr.rel (0) target = $region9
    $region8: #{tpu_custom_call.1} parent=1 // pred_region
      %20 = dma.done [#allocation3], 128
    $region9: #{tpu_custom_call.1} parent=1 // pred_fallthru
      _
    %v21 = vlaneseq
    %v22 = vand.u32 %v21, 127
    %vm23 = vcmp.lt.s32.totalorder %v22, 0
    %v24 = vsub.s32 0, %v22
    %v25 = vsel %vm23, %v24, %v22
    %v26 = vshrl.u32 %v25, 4
    %v27 = vand.u32 %v25, 15
    %v28 = vsub.s32 0, %v27
    %v29 = vsel %vm23, %v28, %v27
    %vm30 = vcmp.ne.s32.totalorder %v29, 0
    %vm31 = vcmp.lt.s32.totalorder %v29, 0
    %vm32 = vmand %vm31, %vm30
    %v33 = vadd.s32 %v29, 16
    %v34 = vsel %vm32, %v33, %v29
    %vm35 = vcmp.lt.s32.totalorder %v34, 0
    %v36 = vsub.s32 0, %v34
    %v37 = vsel %vm35, %v36, %v34
    %v38 = vshrl.u32 %v37, 3
    %v39 = vand.u32 %v37, 7
    %v40 = vsub.s32 0, %v39
    %v41 = vsel %vm35, %v40, %v39
    %vm42 = vcmp.ne.s32.totalorder %v41, 0
    %vm43 = vcmp.lt.s32.totalorder %v41, 0
    %vm44 = vmand %vm43, %vm42
    %v45 = vadd.s32 %v41, 8
    %v46 = vsel %vm44, %v45, %v41
    %v47 = vcvt.s32.f32 %v46
    %v48 = vmul.f32 %v47, -1.1512926
    %v49 = vmul.f32 %v48, 1.442695
    %v50 = vpow.pop %v49
    %v51 = vld [vmem:[#allocation2] sm:$0xff]
    %vm52 = vcmp.lt.s32.totalorder %v34, 8
    %v53 = vsel %vm52, 0.0, 1.5707964
    %v54 = vmul.f32 %v51, %v50
    %v55 = vadd.f32 %v54, %v53
    %v56 = vand.u32 2147483647, %v55
    %vm57 = vcmp.le.f32.partialorder %v56, 0.7853982
    %vm58 = vcmp.lt.s32.totalorder %v55, 0
    %v59 = vand.u32 %v55, 2139095040
    %v60 = vshrl.u32 %v59, 23
    %v61 = vsub.s32 %v60, 127
    %v62 = vand.u32 2147483647, %v55
    %v63 = vand.u32 %v62, 8388607
    %v64 = vor.u32 %v63, 8388608
    %v65 = vsub.s32 0, %v64
    %v66 = vadd.s32 %v61, 1
    %vm67 = vcmp.gt.s32.totalorder %v66, 0
    %v68 = vsel %vm67, %v66, 0
    %v69 = vshrl.u32 %v68, 5
    %v70 = vand.u32 %v68, 31
    %v71 = vsub.s32 32, %v70
    %v72 = vshrl.u32 683565275, %v71
    %v73 = vshll.u32 683565275, %v70
    %v74 = vshrl.u32 2475754826, %v71
    %v75 = vor.u32 %v73, %v74
    %v76 = vshll.u32 2475754826, %v70
    %v77 = vshrl.u32 2131351028, %v71
    %v78 = vor.u32 %v76, %v77
    %v79 = vshll.u32 2131351028, %v70
    %v80 = vshrl.u32 2102212464, %v71
    %v81 = vor.u32 %v79, %v80
    %v82 = vshll.u32 2102212464, %v70
    %v83 = vshrl.u32 920167782, %v71
    %v84 = vor.u32 %v82, %v83
    %v85 = vshll.u32 920167782, %v70
    %v86 = vshrl.u32 1326507024, %v71
    %v87 = vor.u32 %v85, %v86
    %vm88 = vcmp.lt.s32.totalorder %v69, 1
    %vm89 = vcmp.lt.s32.totalorder %v69, 2
    %vm90 = vcmp.lt.s32.totalorder %v69, 3
    %vm91 = vcmp.lt.s32.totalorder %v69, 4
    %v92 = vsel %vm88, %v72, %v75
    %v93 = vsel %vm91, %v81, 2102212464
    %v94 = vsel %vm90, %v78, %v93
    %v95 = vsel %vm89, %v92, %v94
    %v96 = vsel %vm88, %v75, %v78
    %v97 = vsel %vm91, %v84, 920167782
    %v98 = vsel %vm90, %v81, %v97
    %v99 = vsel %vm89, %v96, %v98
    %v100 = vsel %vm88, %v78, %v81
    %v101 = vsel %vm91, %v87, 1326507024
    %v102 = vsel %vm90, %v84, %v101
    %v103 = vsel %vm89, %v100, %v102
    %v104 = vshll.u32 %v64, 8
    %v105 = vmul.u32.u64.compose %v104, %v103
    %v106 = vextract.low.u32 %v105
    %v107 = vextract.high.u32 %v105
    %v108 = vmul.u32.u64.compose %v104, %v99
    %v109 = vextract.low.u32 %v108
    %v110 = vextract.high.u32 %v108
    %v111 = vmul.u32 %v104, %v95
    %v112 = vadd.s32 %v107, %v109
    %vm113 = vc.u32 %v107, %v109
    %v114 = vadd.s32 %v110, 1
    %v115 = vsel %vm113, %v114, %v110
    %v116 = vadd.s32 %v111, %v115
    %v117 = vadd.s32 %v116, 536870912
    %v118 = vshrl.u32 %v117, 30
    %v119 = vshll.u32 %v118, 30
    %v120 = vsub.s32 %v116, %v119
    %vm121 = vcmp.lt.s32.totalorder %v120, 0
    %v122 = vsub.s32 0, %v120
    %v123 = vsel %vm121, %v122, %v120
    %v124 = vclz %v123
    %v125 = vsub.s32 %v124, 2
    %vm126 = vcmp.gt.s32.totalorder 0, %v125
    %v127 = vsel %vm126, 0, %v125
    %v128 = vsub.s32 32, %v127
    %v129 = vshll.u32 %v120, %v127
    %v130 = vshrl.u32 %v112, %v128
    %v131 = vor.u32 %v129, %v130
    %v132 = vsub.s32 4294967266, %v127
    %v133 = vadd.s32 %v132, 127
    %v134 = vshll.u32 %v133, 23
    %v135 = vor.u32 4788187, %v134
    %v136 = vand.u32 2147483647, %v135
    %v138 = vcvt.s32.f32 %v131
    %v139 = vmul.f32 %v138, %v136
    %v140 = vxor.u32 %v139, 2147483648
    %v141 = vsel %vm58, %v140, %v139
    %v142 = vsub.s32 4, %v118
    %v143 = vsel %vm58, %v142, %v118
    %v144 = vsel %vm57, %v55, %v141
    %v145 = vsel %vm57, 0, %v143
    %v146 = vcosq.f32.pop %v144
    %v147 = vsinq.f32.pop %v144
    %vm148 = vweird.f32 %v55
    %v149 = vadd.s32 %v145, 3
    %v150 = vand.u32 %v149, 3
    %vm151 = vcmp.lt.s32.totalorder %v150, 2
    %vm152 = vcmp.eq.s32.totalorder %v150, 0
    %v153 = vxor.u32 %v147, 2147483648
    %v154 = vsel %vm152, %v146, %v153
    %vm155 = vcmp.eq.s32.totalorder %v150, 2
    %v156 = vxor.u32 %v146, 2147483648
    %v157 = vsel %vm155, %v156, %v147
    %v158 = vsel %vm151, %v154, %v157
    %v159 = vsel %vm148, nan, %v158
    %160 = vst [vmem:[#allocation5] sm:$0xff] %v159
    // Predicated region
    $region10: #{tpu_custom_call.1} parent=1 // pred_check
      _
    $region11: #{tpu_custom_call.1} parent=1 // pred_check_branch
      %162 = sbr.rel (0) target = $region13
    $region12: #{tpu_custom_call.1} parent=1 // pred_region
      %s164 = ssub.s32 128, 128
      %165 = vsyncadd [#allocation4], %s164
      %s167 = sshll.u32 [#allocation5], 4
      %s168 = int_to_ptr.vmem [resolvable:$true] %s167
      %170 = dma.vmem_to_hbm [thread:$0]  %s168, 128, %s1, [#allocation4]
    $region13: #{tpu_custom_call.1} parent=1 // pred_fallthru
      _
    // Predicated region
    $region14: #{tpu_custom_call.1} parent=1 // pred_check
      _
    $region15: #{tpu_custom_call.1} parent=1 // pred_check_branch
      %172 = sbr.rel (0) target = $region17
    $region16: #{tpu_custom_call.1} parent=1 // pred_region
      %173 = dma.done [#allocation4], 128
    $region17: #{tpu_custom_call.1} parent=1 // pred_fallthru
      _
    %174 = vsyncpa [#allocation3], 1
    %175 = vsyncpa [#allocation4], 1

</llo_original>
